<compile_context>
chip_gen: v7x
topology: tpu7x:2x2x1
jax: 0.10.0
libtpu: 0.0.40
codegen_flags: <defaults>
</compile_context>

<pallas_src>
import functools
import math

import jax
import jax.numpy as jnp
from jax import lax
from jax.experimental import pallas as pl
from jax.experimental.pallas import tpu as pltpu

F32 = jnp.float32
BF16 = jnp.bfloat16


def _kv_proj_kernel(x_ref, wkv_ref, bkv_ref, k_ref, v_ref, *, n_heads, d_k):
    """Project one (ts, D) tile of x to K/V; store head-major (H, ts, d_k) bf16."""
    x = x_ref[0]                                              # (ts, D) f32
    ts, D = x.shape
    kv = jnp.dot(x.astype(BF16), wkv_ref[...], preferred_element_type=F32) + bkv_ref[...]
    k = kv[:, :D].astype(BF16).reshape(ts, n_heads, d_k)
    v = kv[:, D:].astype(BF16).reshape(ts, n_heads, d_k)
    k_ref[0] = jnp.swapaxes(k, 0, 1)                          # (H, ts, d_k)
    v_ref[0] = jnp.swapaxes(v, 0, 1)


def _encoder_layer_kernel(
    xq_ref, k_ref, v_ref,
    wq_ref, wo_ref, w1_ref, w2_ref, vecs_ref, b1_ref,
    o_ref,
    q_scr, m_scr, l_scr, acc_scr,
    *, n_heads, d_k, seq_len, block_k,
):
    kv_i = pl.program_id(2)
    n_kv = pl.num_programs(2)

    xq = xq_ref[0]                                            # (tq, D) f32 (resident over kv axis)
    tq, D = xq.shape
    vecs = vecs_ref[...]                                      # (7, D) packed bias / LN params
    b_q, b_o, b2 = vecs[0:1], vecs[1:2], vecs[2:3]
    g1, be1, g2, be2 = vecs[3:4], vecs[4:5], vecs[5:6], vecs[6:7]

    # ---- once per (batch, query tile): Q projection (1/sqrt(d_k) folded in) + state init ----
    @pl.when(kv_i == 0)
    def _():
        q = jnp.dot(xq.astype(BF16), wq_ref[...], preferred_element_type=F32) + b_q
        q = q * (1.0 / math.sqrt(d_k))
        q_scr[...] = jnp.swapaxes(q.reshape(tq, n_heads, d_k), 0, 1).astype(BF16)
        m_scr[...] = jnp.full((n_heads, tq, 1), -1e30, F32)
        l_scr[...] = jnp.zeros((n_heads, tq, 1), F32)
        acc_scr[...] = jnp.zeros((n_heads, tq, d_k), F32)

    # ---- flash-style online-softmax accumulation over this KV tile ----
    k = k_ref[0]                                              # (H, tk, d_k) bf16, head-major
    v = v_ref[0]
    s = jnp.einsum("hqd,hkd->hqk", q_scr[...], k, preferred_element_type=F32)
    if seq_len % block_k != 0:                                # static branch: mask padded keys
        col = kv_i * block_k + lax.broadcasted_iota(jnp.int32, (1, 1, block_k), 2)
        s = jnp.where(col < seq_len, s, -1e30)
    m_prev = m_scr[...]
    m_new = jnp.maximum(m_prev, jnp.max(s, axis=-1, keepdims=True))
    alpha = jnp.exp(m_prev - m_new)
    p = jnp.exp(s - m_new)
    l_scr[...] = alpha * l_scr[...] + jnp.sum(p, axis=-1, keepdims=True)
    acc_scr[...] = alpha * acc_scr[...] + jnp.einsum(
        "hqk,hkd->hqd", p.astype(BF16), v, preferred_element_type=F32)
    m_scr[...] = m_new

    # ---- once per (batch, query tile): finish attention, residual+LN1, FFN, residual+LN2 ----
    @pl.when(kv_i == n_kv - 1)
    def _():
        ctx = (acc_scr[...] / l_scr[...]).astype(BF16)        # (H, tq, d_k), exact softmax denom
        ctx2d = jnp.swapaxes(ctx, 0, 1).reshape(tq, D)        # (tq, D) head-concat layout
        attn = jnp.dot(ctx2d, wo_ref[...], preferred_element_type=F32) + b_o   # one D-wide dot

        h1 = xq + attn
        mu = jnp.mean(h1, axis=-1, keepdims=True)
        var = jnp.mean(jnp.square(h1 - mu), axis=-1, keepdims=True)
        h1n = (h1 - mu) * lax.rsqrt(var + 1e-5) * g1 + be1

        f = jnp.dot(h1n.astype(BF16), w1_ref[...], preferred_element_type=F32) + b1_ref[...]
        f = jnp.maximum(f, 0.0)
        f = jnp.dot(f.astype(BF16), w2_ref[...], preferred_element_type=F32) + b2

        h2 = h1n + f
        mu2 = jnp.mean(h2, axis=-1, keepdims=True)
        var2 = jnp.mean(jnp.square(h2 - mu2), axis=-1, keepdims=True)
        o_ref[0] = (h2 - mu2) * lax.rsqrt(var2 + 1e-5) * g2 + be2


def transformer_encoder_layer(x, params, *, n_heads, block=None):
    """x: (B, S, D) float32.  params: dict of weights (PyTorch nn.Linear convention)."""
    B, S, D = x.shape
    assert D % n_heads == 0
    d_k = D // n_heads
    d_ff = params["w1"].shape[0]

    # One tile size for both the query and key/value sequence axes (256 fills v6e/v7x MXU rows).
    if block is None:
        block = 256 if S >= 256 else ((S + 7) // 8) * 8
    ts = block
    S_pad = ((S + ts - 1) // ts) * ts
    n_t = S_pad // ts
    x_pad = x if S_pad == S else jnp.pad(x, ((0, 0), (0, S_pad - S), (0, 0)))

    # Generation-aware VMEM budget: ~48 MiB on v7x (64 MiB), ~96 MiB on v5e/v6e (128 MiB).
    try:
        vmem_cap = pltpu.get_tpu_info().vmem_capacity_bytes
    except Exception:  # info query only; fall back to a conservative (v7x-safe) budget
        vmem_cap = 64 * 1024 * 1024
    vmem_limit = int(vmem_cap * 3 // 4)

    # One-time weight prep (outside the kernels): transpose to (in, out), fuse K/V, cast
    # matmul weights to bf16, pack small bias / LayerNorm vectors into one array.
    wq_t = params["w_q"].T.astype(BF16)                                          # (D, D)
    wkv_t = jnp.concatenate([params["w_k"].T, params["w_v"].T], axis=1).astype(BF16)  # (D, 2D)
    b_kv = jnp.concatenate([params["b_k"], params["b_v"]], axis=1)               # (1, 2D)
    wo_t = params["w_o"].T.astype(BF16)                                          # (D, D)
    w1_t = params["w1"].T.astype(BF16)                                           # (D, d_ff)
    w2_t = params["w2"].T.astype(BF16)                                           # (d_ff, D)
    b1 = params["b1"]                                                            # (1, d_ff)
    vecs = jnp.concatenate([params["b_q"], params["b_o"], params["b2"],
                            params["gamma1"], params["beta1"],
                            params["gamma2"], params["beta2"]], axis=0)          # (7, D)

    # -------- pass 1: K/V projection into bf16 head-major layout (once per batch row) --------
    kv_cost = pl.CostEstimate(
        flops=int(4 * B * S_pad * D * D),
        transcendentals=0,
        bytes_accessed=int(4 * B * S_pad * D + 2 * wkv_t.size + 4 * b_kv.size
                           + 2 * 2 * B * S_pad * D))
    k_hm, v_hm = pl.pallas_call(
        functools.partial(_kv_proj_kernel, n_heads=n_heads, d_k=d_k),
        out_shape=(jax.ShapeDtypeStruct((B, n_heads, S_pad, d_k), BF16),
                   jax.ShapeDtypeStruct((B, n_heads, S_pad, d_k), BF16)),
        grid_spec=pltpu.PrefetchScalarGridSpec(
            num_scalar_prefetch=0,
            grid=(B, n_t),
            in_specs=[
                pl.BlockSpec((1, ts, D), lambda b, j: (b, j, 0)),
                pl.BlockSpec((D, 2 * D), lambda b, j: (0, 0)),
                pl.BlockSpec((1, 2 * D), lambda b, j: (0, 0)),
            ],
            out_specs=[
                pl.BlockSpec((1, n_heads, ts, d_k), lambda b, j: (b, 0, j, 0)),
                pl.BlockSpec((1, n_heads, ts, d_k), lambda b, j: (b, 0, j, 0)),
            ]),
        compiler_params=pltpu.CompilerParams(
            dimension_semantics=("parallel", "parallel"),
            vmem_limit_bytes=vmem_limit),
        cost_estimate=kv_cost,
    )(x_pad, wkv_t, b_kv)

    # -------- pass 2: fused attention (flash over KV tiles) + residual/LN + FFN + residual/LN --------
    flops = int(2 * B * S_pad * D * (2 * D + 2 * d_ff) + 4 * B * S_pad * S_pad * D)
    trans = int(B * n_heads * S_pad * S_pad)
    bytes_accessed = int(4 * B * S_pad * D                      # xq (f32)
                         + 2 * 2 * B * S_pad * D * n_t          # bf16 K and V, re-streamed per q-tile
                         + 4 * B * S_pad * D                    # output
                         + 2 * (wq_t.size + wo_t.size + w1_t.size + w2_t.size)
                         + 4 * (vecs.size + b1.size))
    cost = pl.CostEstimate(flops=flops, transcendentals=trans, bytes_accessed=bytes_accessed)

    out = pl.pallas_call(
        functools.partial(_encoder_layer_kernel, n_heads=n_heads, d_k=d_k,
                          seq_len=S, block_k=ts),
        out_shape=jax.ShapeDtypeStruct((B, S_pad, D), F32),
        grid_spec=pltpu.PrefetchScalarGridSpec(
            num_scalar_prefetch=0,
            grid=(B, n_t, n_t),
            in_specs=[
                pl.BlockSpec((1, ts, D), lambda b, i, j: (b, i, 0)),                 # query rows
                pl.BlockSpec((1, n_heads, ts, d_k), lambda b, i, j: (b, 0, j, 0)),   # K tile (bf16)
                pl.BlockSpec((1, n_heads, ts, d_k), lambda b, i, j: (b, 0, j, 0)),   # V tile (bf16)
                # Grid-invariant weights: constant index maps -> DMA'd once per call.
                pl.BlockSpec((D, D), lambda b, i, j: (0, 0)),                        # W_q^T
                pl.BlockSpec((D, D), lambda b, i, j: (0, 0)),                        # W_o^T
                pl.BlockSpec((D, d_ff), lambda b, i, j: (0, 0)),                     # W1^T
                pl.BlockSpec((d_ff, D), lambda b, i, j: (0, 0)),                     # W2^T
                pl.BlockSpec((7, D), lambda b, i, j: (0, 0)),                        # packed vectors
                pl.BlockSpec((1, d_ff), lambda b, i, j: (0, 0)),                     # b1
            ],
            out_specs=pl.BlockSpec((1, ts, D), lambda b, i, j: (b, i, 0)),
            scratch_shapes=[
                pltpu.VMEM((n_heads, ts, d_k), BF16),      # Q (head-major), computed at kv==0
                pltpu.VMEM((n_heads, ts, 1), F32),         # running max m
                pltpu.VMEM((n_heads, ts, 1), F32),         # running denom l
                pltpu.VMEM((n_heads, ts, d_k), F32),       # context accumulator
            ]),
        compiler_params=pltpu.CompilerParams(
            dimension_semantics=("parallel", "parallel", "arbitrary"),
            vmem_limit_bytes=vmem_limit),
        cost_estimate=cost,
    )(x_pad, k_hm, v_hm, wq_t, wo_t, w1_t, w2_t, vecs, b1)

    return out[:, :S, :] if S_pad != S else out


def _reference(x, p, n_heads):
    """Pure-JAX f32 reference mirroring the PyTorch forward (dropout = identity)."""
    B, S, D = x.shape
    d_k = D // n_heads

    def lin(z, w, b):
        return jnp.einsum("bsd,od->bso", z, w) + b[0]

    q = lin(x, p["w_q"], p["b_q"]).reshape(B, S, n_heads, d_k).transpose(0, 2, 1, 3)
    k = lin(x, p["w_k"], p["b_k"]).reshape(B, S, n_heads, d_k).transpose(0, 2, 1, 3)
    v = lin(x, p["w_v"], p["b_v"]).reshape(B, S, n_heads, d_k).transpose(0, 2, 1, 3)
    s = jnp.einsum("bhqd,bhkd->bhqk", q, k) / math.sqrt(d_k)
    a = jax.nn.softmax(s, axis=-1)
    ctx = jnp.einsum("bhqk,bhkd->bhqd", a, v).transpose(0, 2, 1, 3).reshape(B, S, D)
    attn = lin(ctx, p["w_o"], p["b_o"])

    def ln(z, g, b):
        mu = jnp.mean(z, axis=-1, keepdims=True)
        var = jnp.mean((z - mu) ** 2, axis=-1, keepdims=True)
        return (z - mu) * lax.rsqrt(var + 1e-5) * g[0] + b[0]

    h1 = ln(x + attn, p["gamma1"], p["beta1"])
    ff = lin(jnp.maximum(lin(h1, p["w1"], p["b1"]), 0.0), p["w2"], p["b2"])
    return ln(h1 + ff, p["gamma2"], p["beta2"])


if __name__ == "__main__":
    B, S, D = 2, 8, 32
    n_heads = 4
    d_ff = 64

    key = jax.random.PRNGKey(0)
    ks = jax.random.split(key, 16)
    sc = 0.1
    params = {
        "w_q": sc * jax.random.normal(ks[0], (D, D), jnp.float32),
        "b_q": sc * jax.random.normal(ks[1], (1, D), jnp.float32),
        "w_k": sc * jax.random.normal(ks[2], (D, D), jnp.float32),
        "b_k": sc * jax.random.normal(ks[3], (1, D), jnp.float32),
        "w_v": sc * jax.random.normal(ks[4], (D, D), jnp.float32),
        "b_v": sc * jax.random.normal(ks[5], (1, D), jnp.float32),
        "w_o": sc * jax.random.normal(ks[6], (D, D), jnp.float32),
        "b_o": sc * jax.random.normal(ks[7], (1, D), jnp.float32),
        "w1": sc * jax.random.normal(ks[8], (d_ff, D), jnp.float32),
        "b1": sc * jax.random.normal(ks[9], (1, d_ff), jnp.float32),
        "w2": sc * jax.random.normal(ks[10], (D, d_ff), jnp.float32),
        "b2": sc * jax.random.normal(ks[11], (1, D), jnp.float32),
        "gamma1": jnp.ones((1, D), jnp.float32),
        "beta1": jnp.zeros((1, D), jnp.float32),
        "gamma2": jnp.ones((1, D), jnp.float32),
        "beta2": jnp.zeros((1, D), jnp.float32),
    }

    x = jax.random.normal(ks[12], (B, S, D), jnp.float32)

    out = jax.block_until_ready(transformer_encoder_layer(x, params, n_heads=n_heads))
    ref = _reference(x, params, n_heads)
    assert out.shape == (B, S, D)
    # Tolerance accounts for bf16 MXU inputs (f32 accumulation, exact softmax division).
    err = float(jnp.max(jnp.abs(out - ref)))
    assert jnp.allclose(out, ref, atol=3e-2, rtol=3e-2), f"mismatch vs reference (max abs err {err})"

    # TODO(synk): dropout is treated as identity (inference mode); optional attention mask is None here.
    print("KERNEL_OK")
</pallas_src>

<mosaic_0001>
module attributes {stable_mosaic.version = 11 : i64} {
  func.func @_kv_proj_kernel(%arg0: i32, %arg1: i32, %arg2: memref<1x8x32xf32, #tpu.memory_space<vmem>>, %arg3: memref<32x64xbf16, #tpu.memory_space<vmem>>, %arg4: memref<1x64xf32, #tpu.memory_space<vmem>>, %arg5: memref<1x4x8x8xbf16, #tpu.memory_space<vmem>>, %arg6: memref<1x4x8x8xbf16, #tpu.memory_space<vmem>>) attributes {dimension_semantics = [#tpu.dimension_semantics<parallel>, #tpu.dimension_semantics<parallel>], iteration_bounds = array<i64: 2, 1>, scalar_prefetch = 0 : i64, scratch_operands = 0 : i64, tpu.core_type = #tpu.core_type<tc>, window_params = [{transform_indices = @transform_0, window_bounds = array<i64: 1, 8, 32>}, {pipeline_mode = #tpu.pipeline_mode<synchronous>, transform_indices = @transform_1, window_bounds = array<i64: 32, 64>}, {pipeline_mode = #tpu.pipeline_mode<synchronous>, transform_indices = @transform_2, window_bounds = array<i64: 1, 64>}, {transform_indices = @transform_3, window_bounds = array<i64: 1, 4, 8, 8>}, {transform_indices = @transform_4, window_bounds = array<i64: 1, 4, 8, 8>}]} {
    %c0 = arith.constant 0 : index
    %c0_0 = arith.constant 0 : index
    %c0_1 = arith.constant 0 : index
    %0 = vector.load %arg2[%c0, %c0_0, %c0_1] : memref<1x8x32xf32, #tpu.memory_space<vmem>>, vector<1x8x32xf32>
    %1 = vector.shape_cast %0 : vector<1x8x32xf32> to vector<8x32xf32>
    %2 = arith.truncf %1 : vector<8x32xf32> to vector<8x32xbf16>
    %c0_2 = arith.constant 0 : index
    %c0_3 = arith.constant 0 : index
    %3 = vector.load %arg3[%c0_2, %c0_3] : memref<32x64xbf16, #tpu.memory_space<vmem>>, vector<32x64xbf16>
    %cst = arith.constant dense<0.000000e+00> : vector<8x64xf32>
    %4 = tpu.matmul %2, %3, %cst {dimension_numbers = #tpu.dot_dimension_numbers<[1], [0], [0], [1], [0, 0, 1, 1], [], []>} : vector<8x32xbf16>, vector<32x64xbf16>, vector<8x64xf32> -> vector<8x64xf32>
    %c0_4 = arith.constant 0 : index
    %c0_5 = arith.constant 0 : index
    %5 = vector.load %arg4[%c0_4, %c0_5] : memref<1x64xf32, #tpu.memory_space<vmem>>, vector<1x64xf32>
    %6 = vector.broadcast %5 : vector<1x64xf32> to vector<8x64xf32>
    %7 = arith.addf %4, %6 : vector<8x64xf32>
    %8 = vector.extract_strided_slice %7 {offsets = [0, 0], sizes = [8, 32], strides = [1, 1]} : vector<8x64xf32> to vector<8x32xf32>
    %9 = arith.truncf %8 : vector<8x32xf32> to vector<8x32xbf16>
    %10 = vector.shape_cast %9 : vector<8x32xbf16> to vector<8x4x8xbf16>
    %11 = vector.extract_strided_slice %7 {offsets = [0, 32], sizes = [8, 32], strides = [1, 1]} : vector<8x64xf32> to vector<8x32xf32>
    %12 = arith.truncf %11 : vector<8x32xf32> to vector<8x32xbf16>
    %13 = vector.shape_cast %12 : vector<8x32xbf16> to vector<8x4x8xbf16>
    %14 = tpu.transpose %10, [1, 0, 2] : vector<8x4x8xbf16> -> vector<4x8x8xbf16>
    %c0_6 = arith.constant 0 : index
    %c0_7 = arith.constant 0 : index
    %c0_8 = arith.constant 0 : index
    %c0_9 = arith.constant 0 : index
    %15 = vector.load %arg5[%c0_6, %c0_7, %c0_8, %c0_9] : memref<1x4x8x8xbf16, #tpu.memory_space<vmem>>, vector<1x4x8x8xbf16>
    %16 = vector.shape_cast %15 : vector<1x4x8x8xbf16> to vector<4x8x8xbf16>
    %17 = vector.shape_cast %14 : vector<4x8x8xbf16> to vector<1x4x8x8xbf16>
    tpu.vector_store %arg5[%c0_6, %c0_7, %c0_8, %c0_9], %17 {strides = array<i32>} : memref<1x4x8x8xbf16, #tpu.memory_space<vmem>>, vector<1x4x8x8xbf16>,
    %18 = tpu.transpose %13, [1, 0, 2] : vector<8x4x8xbf16> -> vector<4x8x8xbf16>
    %c0_10 = arith.constant 0 : index
    %c0_11 = arith.constant 0 : index
    %c0_12 = arith.constant 0 : index
    %c0_13 = arith.constant 0 : index
    %19 = vector.load %arg6[%c0_10, %c0_11, %c0_12, %c0_13] : memref<1x4x8x8xbf16, #tpu.memory_space<vmem>>, vector<1x4x8x8xbf16>
    %20 = vector.shape_cast %19 : vector<1x4x8x8xbf16> to vector<4x8x8xbf16>
    %21 = vector.shape_cast %18 : vector<4x8x8xbf16> to vector<1x4x8x8xbf16>
    tpu.vector_store %arg6[%c0_10, %c0_11, %c0_12, %c0_13], %21 {strides = array<i32>} : memref<1x4x8x8xbf16, #tpu.memory_space<vmem>>, vector<1x4x8x8xbf16>,
    return
  }
  func.func @transform_0(%arg0: i32, %arg1: i32) -> (i32, i32, i32) {
    %c0_i32 = arith.constant 0 : i32
    %c0_i32_0 = arith.constant 0 : i32
    return %arg0, %arg1, %c0_i32 : i32, i32, i32
  }
  func.func @transform_1(%arg0: i32, %arg1: i32) -> (i32, i32) {
    %c0_i32 = arith.constant 0 : i32
    %c0_i32_0 = arith.constant 0 : i32
    %c0_i32_1 = arith.constant 0 : i32
    return %c0_i32, %c0_i32_0 : i32, i32
  }
  func.func @transform_2(%arg0: i32, %arg1: i32) -> (i32, i32) {
    %c0_i32 = arith.constant 0 : i32
    %c0_i32_0 = arith.constant 0 : i32
    %c0_i32_1 = arith.constant 0 : i32
    return %c0_i32, %c0_i32_0 : i32, i32
  }
  func.func @transform_3(%arg0: i32, %arg1: i32) -> (i32, i32, i32, i32) {
    %c0_i32 = arith.constant 0 : i32
    %c0_i32_0 = arith.constant 0 : i32
    %c0_i32_1 = arith.constant 0 : i32
    return %arg0, %c0_i32, %arg1, %c0_i32_0 : i32, i32, i32, i32
  }
  func.func @transform_4(%arg0: i32, %arg1: i32) -> (i32, i32, i32, i32) {
    %c0_i32 = arith.constant 0 : i32
    %c0_i32_0 = arith.constant 0 : i32
    %c0_i32_1 = arith.constant 0 : i32
    return %arg0, %c0_i32, %arg1, %c0_i32_0 : i32, i32, i32, i32
  }
}

</mosaic_0001>

<llo_original>
// kernel: tpu_custom_call.1
$region0: #{tpu_custom_call.1}
  #allocation0 [shape = 'u32[]', space=smem, size = 0x4, offset = 0x4, fixed_abs, tag = 'smem constant byte address 0x4 - core index']
  #allocation1 [shape = 'u32[144,128]{1,0:T(1,128)}', space=vmem, size = 0x12000, scoped, tag = 'internal scratch']
  %s0 = inlined_call_operand.hbm [shape: f32[2,8,32], index: 0, kind: input, shape index: {}]
  %s1 = inlined_call_operand.hbm [shape: bf16[32,64], index: 1, kind: input, shape index: {}]
  %s2 = inlined_call_operand.vmem [shape: f32[1,64], index: 2, kind: input, shape index: {}]
  %s3 = inlined_call_operand.hbm [shape: bf16[2,4,8,8], index: 3, kind: output, shape index: {0}]
  %s4 = inlined_call_operand.hbm [shape: bf16[2,4,8,8], index: 4, kind: output, shape index: {1}]
  %5 = xla_tuple %s3, %s4
  %s6 = sld [smem:[#allocation0]]
  $region61: #{tpu_custom_call.1} parent=0
    _
  %s8 = ssub.s32 1, %s6
  %s9 = scalar_select 0, %s8, %s6
  $region1: #{tpu_custom_call.1} parent=0
    #allocation2 [shape = 'u8[8192]{0}', space=vmem, size = 0x2000, scoped, tag = 'input window, operand 0']
    #allocation3 [shape = 's32[2]{0}', space=sflag, size = 0x8, scoped, tag = 'scoped memory for tpu_custom_call.1']
    #allocation4 [shape = 's32[2]{0}', space=sflag, size = 0x8, scoped, tag = 'scoped memory for tpu_custom_call.1']
    #allocation5 [shape = 'u8[8192]{0}', space=vmem, size = 0x2000, scoped, tag = 'input window, operand 1, single buffered']
    #allocation6 [shape = 's32[1]{0}', space=sflag, size = 0x4, scoped, tag = 'scoped memory for tpu_custom_call.1']
    #allocation7 [shape = 'u8[16384]{0}', space=vmem, size = 0x4000, scoped, tag = 'output window, operand 0']
    #allocation8 [shape = 'u8[16384]{0}', space=vmem, size = 0x4000, scoped, tag = 'output window, operand 1']
    #allocation9 [shape = 's32[2]{0}', space=sflag, size = 0x8, scoped, tag = 'scoped memory for tpu_custom_call.1']
    %10 = vsyncpa [#allocation3], 0
    %s11 = scalar_lea.sflag [#allocation3], 1
    %12 = vsyncpa %s11, 0
    %13 = vsyncpa [#allocation6], 0
    %14 = vsyncpa [#allocation4], 0
    %s15 = scalar_lea.sflag [#allocation4], 1
    %16 = vsyncpa %s15, 0
    %17 = vsyncpa [#allocation9], 0
    %s18 = scalar_lea.sflag [#allocation9], 1
    %19 = vsyncpa %s18, 0
    loop: start=0, step=1, limit=4
    $region2: #{tpu_custom_call.1} parent=1 // loop_pre_header
      _
    $region3: #{tpu_custom_call.1} parent=1 // loop_header
      %s21 = sphi 0, %s25
      %p22 = scmp.ge.s32.totalorder %s21, 4
      %s28 = sphi 0, %s40
      %s29 = sphi 0, %s36
      %s30 = sphi 0, %s28
      %s31 = sphi 0, %s29
      %s32 = sphi 0, %s30
      %s33 = sphi 0, %s31
      %s45 = sphi 0, %s47
      %s48 = sphi 0, %s45
      %s49 = sphi 0, %s48
      %s65 = sphi 0, %s49
      %s69 = sphi 0, %s69
      %s71 = sphi 0, %s69
      %s72 = sphi 0, %s71
      %s86 = sphi 0, %s72
      %s90 = sphi 0, %s90
      %s92 = sphi 0, %s90
      %s93 = sphi 0, %s92
      %s107 = sphi 0, %s93
      %s115 = sphi 0, %s117
      %s118 = sphi 0, %s115
      %s119 = sphi 0, %s118
      %s135 = sphi 0, %s119
      %s143 = sphi 0, %s145
      %s146 = sphi 0, %s143
      %s147 = sphi 0, %s146
      %s163 = sphi 0, %s147
    $region4: #{tpu_custom_call.1} parent=1 // loop_header_branch
      %24 = sbr.rel (%p22) target = $region8
    $region5: #{tpu_custom_call.1} parent=1 // loop_body
      %s26 = ssub.s32 %s21, 1
      %s27 = ssub.s32 %s21, 2
      %s34 = sadd.s32 1, %s29
      %p35 = scmp.ge.s32.totalorder %s34, 1
      %s36 = scalar_select %p35, 0, %s34
      %s37 = sadd.s32 1, %s28
      %s38 = scalar_select %p35, %s37, %s28
      %p39 = scmp.ge.s32.totalorder %s38, 2
      %s40 = scalar_select %p39, 0, %s38
      %s41 = ssub.s32 %s28, %s40
      %s42 = ssub.s32 %s29, %s36
      %s43 = sor.u32 %s41, %s42
      %p44 = scmp.eq.s32.totalorder %s43, 0
      %s46 = sadd.s32 %s45, 1
      %s47 = scalar_select %p44, %s45, %s46
      %p50 = pneg %p44
      %p51 = scmp.eq.s32.totalorder %s21, 1
      %p52 = por %p50, %p51
      %p53 = scmp.ne.s32.totalorder %s45, %s48
      %p54 = scmp.eq.s32.totalorder %s21, 0
      %p55 = por %p53, %p54
      %p56 = scmp.ne.s32.totalorder %s45, %s48
      %p57 = scmp.eq.s32.totalorder %s26, 1
      %p58 = por %p56, %p57
      %p59 = scmp.ne.s32.totalorder %s48, %s49
      %p60 = scmp.eq.s32.totalorder %s26, 0
      %p61 = por %p59, %p60
      %p62 = scmp.ne.s32.totalorder %s48, %s49
      %p63 = scmp.eq.s32.totalorder %s27, 1
      %p64 = por %p62, %p63
      %p66 = scmp.ne.s32.totalorder %s49, %s65
      %p67 = scmp.eq.s32.totalorder %s27, 0
      %p68 = por %p66, %p67
      %s70 = sadd.s32 %s69, 1
      %p73 = scmp.eq.s32.totalorder %s21, 1
      %p74 = scmp.ne.s32.totalorder %s69, %s71
      %p75 = scmp.eq.s32.totalorder %s21, 0
      %p76 = por %p74, %p75
      %p77 = scmp.ne.s32.totalorder %s69, %s71
      %p78 = scmp.eq.s32.totalorder %s26, 1
      %p79 = por %p77, %p78
      %p80 = scmp.ne.s32.totalorder %s71, %s72
      %p81 = scmp.eq.s32.totalorder %s26, 0
      %p82 = por %p80, %p81
      %p83 = scmp.ne.s32.totalorder %s71, %s72
      %p84 = scmp.eq.s32.totalorder %s27, 1
      %p85 = por %p83, %p84
      %p87 = scmp.ne.s32.totalorder %s72, %s86
      %p88 = scmp.eq.s32.totalorder %s27, 0
      %p89 = por %p87, %p88
      %s91 = sadd.s32 %s90, 1
      %p94 = scmp.eq.s32.totalorder %s21, 1
      %p95 = scmp.ne.s32.totalorder %s90, %s92
      %p96 = scmp.eq.s32.totalorder %s21, 0
      %p97 = por %p95, %p96
      %p98 = scmp.ne.s32.totalorder %s90, %s92
      %p99 = scmp.eq.s32.totalorder %s26, 1
      %p100 = por %p98, %p99
      %p101 = scmp.ne.s32.totalorder %s92, %s93
      %p102 = scmp.eq.s32.totalorder %s26, 0
      %p103 = por %p101, %p102
      %p104 = scmp.ne.s32.totalorder %s92, %s93
      %p105 = scmp.eq.s32.totalorder %s27, 1
      %p106 = por %p104, %p105
      %p108 = scmp.ne.s32.totalorder %s93, %s107
      %p109 = scmp.eq.s32.totalorder %s27, 0
      %p110 = por %p108, %p109
      %s111 = ssub.s32 %s28, %s40
      %s112 = ssub.s32 %s29, %s36
      %s113 = sor.u32 %s111, %s112
      %p114 = scmp.eq.s32.totalorder %s113, 0
      %s116 = sadd.s32 %s115, 1
      %s117 = scalar_select %p114, %s115, %s116
      %p120 = pneg %p114
      %p121 = scmp.eq.s32.totalorder %s21, 1
      %p122 = por %p120, %p121
      %p123 = scmp.ne.s32.totalorder %s115, %s118
      %p124 = scmp.eq.s32.totalorder %s21, 0
      %p125 = por %p123, %p124
      %p126 = scmp.ne.s32.totalorder %s115, %s118
      %p127 = scmp.eq.s32.totalorder %s26, 1
      %p128 = por %p126, %p127
      %p129 = scmp.ne.s32.totalorder %s118, %s119
      %p130 = scmp.eq.s32.totalorder %s26, 0
      %p131 = por %p129, %p130
      %p132 = scmp.ne.s32.totalorder %s118, %s119
      %p133 = scmp.eq.s32.totalorder %s27, 1
      %p134 = por %p132, %p133
      %p136 = scmp.ne.s32.totalorder %s119, %s135
      %p137 = scmp.eq.s32.totalorder %s27, 0
      %p138 = por %p136, %p137
      %s139 = ssub.s32 %s28, %s40
      %s140 = ssub.s32 %s29, %s36
      %s141 = sor.u32 %s139, %s140
      %p142 = scmp.eq.s32.totalorder %s141, 0
      %s144 = sadd.s32 %s143, 1
      %s145 = scalar_select %p142, %s143, %s144
      %p148 = pneg %p142
      %p149 = scmp.eq.s32.totalorder %s21, 1
      %p150 = por %p148, %p149
      %p151 = scmp.ne.s32.totalorder %s143, %s146
      %p152 = scmp.eq.s32.totalorder %s21, 0
      %p153 = por %p151, %p152
      %p154 = scmp.ne.s32.totalorder %s143, %s146
      %p155 = scmp.eq.s32.totalorder %s26, 1
      %p156 = por %p154, %p155
      %p157 = scmp.ne.s32.totalorder %s146, %s147
      %p158 = scmp.eq.s32.totalorder %s26, 0
      %p159 = por %p157, %p158
      %p160 = scmp.ne.s32.totalorder %s146, %s147
      %p161 = scmp.eq.s32.totalorder %s27, 1
      %p162 = por %p160, %p161
      %p164 = scmp.ne.s32.totalorder %s147, %s163
      %p165 = scmp.eq.s32.totalorder %s27, 0
      %p166 = por %p164, %p165
      %p167 = scmp.le.s32.totalorder 1, %s21
      %p168 = scmp.lt.s32.totalorder %s21, 3
      %p169 = pnand %p167, %p168
      %p170 = pneg %p169
      // Predicated region
      $region9: #{tpu_custom_call.1} parent=5 // pred_check
        _
      $region10: #{tpu_custom_call.1} parent=5 // pred_check_branch
        %172 = sbr.rel (%p169) target = $region12
      $region11: #{tpu_custom_call.1} parent=5 // pred_region
        %s173 = ssub.s32 %s21, 1
        // Predicated region
        $region13: #{tpu_custom_call.1} parent=11 // pred_check
          %p174 = pneg %p82
        $region14: #{tpu_custom_call.1} parent=11 // pred_check_branch
          %176 = sbr.rel (%p174) target = $region16
        $region15: #{tpu_custom_call.1} parent=11 // pred_region
          %s178 = ssub.s32 256, 256
          %179 = vsyncadd [#allocation6], %s178
          %s180 = sshll.u32 [#allocation5], 4
          %s181 = int_to_ptr.vmem [resolvable:$true] %s180
          %186 = dma.hbm_to_vmem [thread:$0]  %s1, 256, %s181, [#allocation6], 64, 64, 4
        $region16: #{tpu_custom_call.1} parent=11 // pred_fallthru
          _
        // Predicated region
        $region17: #{tpu_custom_call.1} parent=11 // pred_check
          %p187 = pneg %p103
        $region18: #{tpu_custom_call.1} parent=11 // pred_check_branch
          %189 = sbr.rel (%p187) target = $region20
        $region19: #{tpu_custom_call.1} parent=11 // pred_region
          _
        $region20: #{tpu_custom_call.1} parent=11 // pred_fallthru
          _
      $region12: #{tpu_custom_call.1} parent=5 // pred_fallthru
        _
      %p190 = scmp.lt.s32.totalorder %s21, 2
      // Predicated region
      $region21: #{tpu_custom_call.1} parent=5 // pred_check
        %p191 = pneg %p190
      $region22: #{tpu_custom_call.1} parent=5 // pred_check_branch
        %193 = sbr.rel (%p191) target = $region24
      $region23: #{tpu_custom_call.1} parent=5 // pred_region
        // Predicated region
        $region25: #{tpu_custom_call.1} parent=23 // pred_check
          %p194 = pneg %p55
        $region26: #{tpu_custom_call.1} parent=23 // pred_check_branch
          %196 = sbr.rel (%p194) target = $region28
        $region27: #{tpu_custom_call.1} parent=23 // pred_region
          %s197 = sand.u32 %s45, 1
          %s198 = scalar_lea.sflag [#allocation3], %s197
          %s199 = sand.u32 %s45, 1
          %s200 = smul.addr %s199, 8
          %s201 = scalar_lea.vmem [#allocation2], %s200
          %s203 = ssub.s32 128, 128
          %204 = vsyncadd %s198, %s203
          %s205 = sadd.s32 %s29, %s28
          %s206 = smul.addr %s205, 128
          %s207 = scalar_lea.hbm %s0, %s206
          %s209 = sshll.u32 %s201, 4
          %s210 = int_to_ptr.vmem [resolvable:$true] %s209
          %212 = dma.hbm_to_vmem [thread:$0]  %s207, 128, %s210, %s198
        $region28: #{tpu_custom_call.1} parent=23 // pred_fallthru
          _
      $region24: #{tpu_custom_call.1} parent=5 // pred_fallthru
        _
      %p213 = scmp.le.s32.totalorder 1, %s21
      %p214 = scmp.lt.s32.totalorder %s21, 3
      %p215 = pnand %p213, %p214
      %p216 = pneg %p215
      // Predicated region
      $region29: #{tpu_custom_call.1} parent=5 // pred_check
        _
      $region30: #{tpu_custom_call.1} parent=5 // pred_check_branch
        %218 = sbr.rel (%p215) target = $region32
      $region31: #{tpu_custom_call.1} parent=5 // pred_region
        %s219 = ssub.s32 %s21, 1
        %s220 = sand.u32 %s48, 1
        %s221 = scalar_lea.sflag [#allocation3], %s220
        %s222 = sand.u32 %s48, 1
        %s223 = smul.addr %s222, 8
        %s224 = scalar_lea.vmem [#allocation2], %s223
        // Predicated region
        $region33: #{tpu_custom_call.1} parent=31 // pred_check
          %p225 = pneg %p61
        $region34: #{tpu_custom_call.1} parent=31 // pred_check_branch
          %227 = sbr.rel (%p225) target = $region36
        $region35: #{tpu_custom_call.1} parent=31 // pred_region
          %228 = dma.done %s221, 128
        $region36: #{tpu_custom_call.1} parent=31 // pred_fallthru
          _
        // Predicated region
        $region37: #{tpu_custom_call.1} parent=31 // pred_check
          %p229 = pneg %p82
        $region38: #{tpu_custom_call.1} parent=31 // pred_check_branch
          %231 = sbr.rel (%p229) target = $region40
        $region39: #{tpu_custom_call.1} parent=31 // pred_region
          %232 = dma.done [#allocation6], 256
        $region40: #{tpu_custom_call.1} parent=31 // pred_fallthru
          _
        %s233 = sand.u32 %s48, 1
        %s234 = scalar_lea.sflag [#allocation3], %s233
        %s235 = sand.u32 %s48, 1
        %s236 = smul.addr %s235, 8
        %s237 = scalar_lea.vmem [#allocation2], %s236
        %p238 = pneg %p61
        %p239 = pneg %p58
        %p240 = pneg %p82
        %p241 = pneg %p79
        %p242 = pneg %p103
        %p243 = pneg %p100
        %p244 = pneg %p131
        %p245 = pneg %p128
        %s246 = sand.u32 %s118, 1
        %s247 = scalar_lea.sflag [#allocation4], %s246
        %s248 = sand.u32 %s118, 1
        %s249 = smul.addr %s248, 16
        %s250 = scalar_lea.vmem [#allocation7], %s249
        %p251 = pneg %p159
        %p252 = pneg %p156
        %s253 = sand.u32 %s146, 1
        %s254 = scalar_lea.sflag [#allocation9], %s253
        %s255 = sand.u32 %s146, 1
        %s256 = smul.addr %s255, 16
        %s257 = scalar_lea.vmem [#allocation8], %s256
        %v259 = vld [vmem:[%s224] sm:$0xff]
        %v260 = vpack.c.bf16 %v259, %v259
        %v261 = vld [vmem:[#allocation5] sm:$0xf]
        %v262 = vld [vmem:[#allocation5 + $0x4] sm:$0xf]
        %v263 = vld [vmem:[#allocation5 + $0x8] sm:$0xf]
        %v264 = vld [vmem:[#allocation5 + $0xc] sm:$0xf]
        %v265 = vld [vmem:[%s2] sm:$0x1]
        %v267 = vlaneseq
        %v268 = vshrl.u32 %v267, 7
        %v269 = vsub.s32 0, %v268
        %v270 = vrot.slane %v265, %v269
        %v276 = vunpack.c.l.b16 %v261
        %v277 = vunpack.c.l.b16 %v262
        %v278 = vunpack.c.l.b16 %v263
        %v279 = vunpack.c.l.b16 %v264
        %v280 = vpack.c.b16 %v277, %v276
        %v281 = vpack.c.b16 %v279, %v278
        %vm284 = vcmask 261120
        %v286 = vsel %vm284, %v260, 0
        %288 = vmatprep.subr.bf16.mxu0 0
        %289 = vmatpush1.bf16.msra.mxu0 %v280
        %290 = vmatprep.subr.bf16.mxu0 0
        %291 = vmatpush1.bf16.msra.mxu0 %v281
        %292 = vmatprep.subr.bf16.mxu0 0
        %293 = vmatpush1.bf16.msra.mxu0 0
        %294 = vmatprep.subr.bf16.mxu0 0
        %295 = vmatpush1.bf16.msra.mxu0 0
        %296 = vmatprep.subr.bf16.mxu0 0
        %297 = vmatpush1.bf16.msra.mxu0 0
        %298 = vmatprep.subr.bf16.mxu0 0
        %299 = vmatpush1.bf16.msra.mxu0 0
        %300 = vmatprep.subr.bf16.mxu0 0
        %301 = vmatpush1.bf16.msra.mxu0 0
        %302 = vmatprep.subr.bf16.mxu0 0
        %303 = vmatpush1.bf16.msra.mxu0 0
        %304 = vmatprep.subr.bf16.mxu0 0
        %305 = vmatpush1.bf16.msra.mxu0 0
        %306 = vmatprep.subr.bf16.mxu0 0
        %307 = vmatpush1.bf16.msra.mxu0 0
        %308 = vmatprep.subr.bf16.mxu0 0
        %309 = vmatpush1.bf16.msra.mxu0 0
        %310 = vmatprep.subr.bf16.mxu0 0
        %311 = vmatpush1.bf16.msra.mxu0 0
        %312 = vmatprep.subr.bf16.mxu0 0
        %313 = vmatpush1.bf16.msra.mxu0 0
        %314 = vmatprep.subr.bf16.mxu0 0
        %315 = vmatpush1.bf16.msra.mxu0 0
        %316 = vmatprep.subr.bf16.mxu0 0
        %317 = vmatpush1.bf16.msra.mxu0 0
        %318 = vmatprep.subr.bf16.mxu0 0
        %319 = vmatpush1.bf16.msra.mxu0 0
        %320 = vmatprep.mubr.bf16.mxu0 0
        %321 = vmatmul.mubr.bf16.gmra.mrb[0].mxu0 %v286
        %v322 = vpop.f32.mrb[0].mxu0
        %v323 = vadd.f32 %v270, %v322
        %v324 = vpop.f32.mrb[0].mxu0
        %v325 = vpop.f32.mrb[0].mxu0
        %v326 = vpop.f32.mrb[0].mxu0
        %327 = vdwg.mxu0
        %v328 = vpack.c.bf16 %v323, %v323
        %330 = vrot.lane.b32.xlu0 %v328, 120
        %v331 = vpop.permute.xlu0 %330
        %332 = vrot.lane.b32.xlu0 %v328, 112
        %v333 = vpop.permute.xlu0 %332
        %334 = vrot.lane.b32.xlu0 %v328, 104
        %v335 = vpop.permute.xlu0 %334
        %v337 = vunpack.c.l.s4 1983009808
        %v338 = vunpack.c.0.s8 %v337
        %v339 = vlaneseq
        %v340 = vshrl.u32 %v339, 7
        %v341 = vsub.s32 %v338, %v340
        %v342 = vrot.slane %v328, %v341
        %v345 = vunpack.c.l.s4 1983009808
        %v346 = vunpack.c.0.s8 %v345
        %v347 = vlaneseq
        %v348 = vshrl.u32 %v347, 7
        %v349 = vsub.s32 %v346, %v348
        %v350 = vrot.slane %v333, %v349
        %v351 = vcombine.low %v342, %v350
        %v352 = vcombine.high %v342, %v350
        %v354 = vunpack.c.l.s4 1934713408
        %v355 = vunpack.c.0.s8 %v354
        %v356 = vlaneseq
        %v357 = vshrl.u32 %v356, 7
        %v358 = vsub.s32 %v355, %v357
        %v359 = vrot.slane %v351, %v358
        %v361 = vunpack.c.l.s4 1934713408
        %v362 = vunpack.c.0.s8 %v361
        %v363 = vlaneseq
        %v364 = vshrl.u32 %v363, 7
        %v365 = vsub.s32 %v362, %v364
        %v366 = vrot.slane %v352, %v365
        %v367 = vcombine.high %v359, 0
        %v368 = vcombine.high %v366, 0
        %v371 = vunpack.c.l.s4 1983009808
        %v372 = vunpack.c.0.s8 %v371
        %v373 = vlaneseq
        %v374 = vshrl.u32 %v373, 7
        %v375 = vsub.s32 %v372, %v374
        %v376 = vrot.slane %v331, %v375
        %v379 = vunpack.c.l.s4 1983009808
        %v380 = vunpack.c.0.s8 %v379
        %v381 = vlaneseq
        %v382 = vshrl.u32 %v381, 7
        %v383 = vsub.s32 %v380, %v382
        %v384 = vrot.slane %v335, %v383
        %v385 = vcombine.low %v376, %v384
        %v386 = vcombine.high %v376, %v384
        %v388 = vunpack.c.l.s4 1934713408
        %v389 = vunpack.c.0.s8 %v388
        %v390 = vlaneseq
        %v391 = vshrl.u32 %v390, 7
        %v392 = vsub.s32 %v389, %v391
        %v393 = vrot.slane %v385, %v392
        %v395 = vunpack.c.l.s4 1934713408
        %v396 = vunpack.c.0.s8 %v395
        %v397 = vlaneseq
        %v398 = vshrl.u32 %v397, 7
        %v399 = vsub.s32 %v396, %v398
        %v400 = vrot.slane %v386, %v399
        %v401 = vcombine.high %v393, 0
        %v402 = vcombine.high %v400, 0
        %v405 = vpack.i.b16 %v393, %v359
        %v407 = vshrl.u32 %v359, 16
        %v408 = vshrl.u32 %v393, 16
        %v409 = vpack.i.b16 %v408, %v407
        %v413 = vpack.i.b16 %v401, %v367
        %v415 = vshrl.u32 %v367, 16
        %v416 = vshrl.u32 %v401, 16
        %v417 = vpack.i.b16 %v416, %v415
        %v421 = vpack.i.b16 %v400, %v366
        %v423 = vshrl.u32 %v366, 16
        %v424 = vshrl.u32 %v400, 16
        %v425 = vpack.i.b16 %v424, %v423
        %v429 = vpack.i.b16 %v402, %v368
        %v431 = vshrl.u32 %v368, 16
        %v432 = vshrl.u32 %v402, 16
        %v433 = vpack.i.b16 %v432, %v431
        %435 = vrot.lane.b32.xlu0 %v328, 96
        %v436 = vpop.permute.xlu0 %435
        %437 = vrot.lane.b32.xlu0 %v331, 96
        %v438 = vpop.permute.xlu0 %437
        %439 = vrot.lane.b32.xlu0 %v333, 96
        %v440 = vpop.permute.xlu0 %439
        %441 = vrot.lane.b32.xlu0 %v335, 96
        %v442 = vpop.permute.xlu0 %441
        %v445 = vunpack.c.l.s4 1983009808
        %v446 = vunpack.c.0.s8 %v445
        %v447 = vlaneseq
        %v448 = vshrl.u32 %v447, 7
        %v449 = vsub.s32 %v446, %v448
        %v450 = vrot.slane %v436, %v449
        %v453 = vunpack.c.l.s4 1983009808
        %v454 = vunpack.c.0.s8 %v453
        %v455 = vlaneseq
        %v456 = vshrl.u32 %v455, 7
        %v457 = vsub.s32 %v454, %v456
        %v458 = vrot.slane %v440, %v457
        %v459 = vcombine.low %v450, %v458
        %v460 = vcombine.high %v450, %v458
        %v462 = vunpack.c.l.s4 1934713408
        %v463 = vunpack.c.0.s8 %v462
        %v464 = vlaneseq
        %v465 = vshrl.u32 %v464, 7
        %v466 = vsub.s32 %v463, %v465
        %v467 = vrot.slane %v459, %v466
        %v469 = vunpack.c.l.s4 1934713408
        %v470 = vunpack.c.0.s8 %v469
        %v471 = vlaneseq
        %v472 = vshrl.u32 %v471, 7
        %v473 = vsub.s32 %v470, %v472
        %v474 = vrot.slane %v460, %v473
        %v475 = vcombine.high %v467, 0
        %v476 = vcombine.high %v474, 0
        %v479 = vunpack.c.l.s4 1983009808
        %v480 = vunpack.c.0.s8 %v479
        %v481 = vlaneseq
        %v482 = vshrl.u32 %v481, 7
        %v483 = vsub.s32 %v480, %v482
        %v484 = vrot.slane %v438, %v483
        %v487 = vunpack.c.l.s4 1983009808
        %v488 = vunpack.c.0.s8 %v487
        %v489 = vlaneseq
        %v490 = vshrl.u32 %v489, 7
        %v491 = vsub.s32 %v488, %v490
        %v492 = vrot.slane %v442, %v491
        %v493 = vcombine.low %v484, %v492
        %v494 = vcombine.high %v484, %v492
        %v496 = vunpack.c.l.s4 1934713408
        %v497 = vunpack.c.0.s8 %v496
        %v498 = vlaneseq
        %v499 = vshrl.u32 %v498, 7
        %v500 = vsub.s32 %v497, %v499
        %v501 = vrot.slane %v493, %v500
        %v503 = vunpack.c.l.s4 1934713408
        %v504 = vunpack.c.0.s8 %v503
        %v505 = vlaneseq
        %v506 = vshrl.u32 %v505, 7
        %v507 = vsub.s32 %v504, %v506
        %v508 = vrot.slane %v494, %v507
        %v509 = vcombine.high %v501, 0
        %v510 = vcombine.high %v508, 0
        %v513 = vpack.i.b16 %v501, %v467
        %v515 = vshrl.u32 %v467, 16
        %v516 = vshrl.u32 %v501, 16
        %v517 = vpack.i.b16 %v516, %v515
        %v521 = vpack.i.b16 %v509, %v475
        %v523 = vshrl.u32 %v475, 16
        %v524 = vshrl.u32 %v509, 16
        %v525 = vpack.i.b16 %v524, %v523
        %v529 = vpack.i.b16 %v508, %v474
        %v531 = vshrl.u32 %v474, 16
        %v532 = vshrl.u32 %v508, 16
        %v533 = vpack.i.b16 %v532, %v531
        %v537 = vpack.i.b16 %v510, %v476
        %v539 = vshrl.u32 %v476, 16
        %v540 = vshrl.u32 %v510, 16
        %v541 = vpack.i.b16 %v540, %v539
        %v543 = vcombine.low %v405, %v421
        %v545 = vunpack.c.l.s4 1983009808
        %v546 = vunpack.c.0.s8 %v545
        %v547 = vlaneseq
        %v548 = vshrl.u32 %v547, 7
        %v549 = vsub.s32 %v546, %v548
        %v550 = vrot.slane %v543, %v549
        %v551 = vcombine.low %v413, %v429
        %v553 = vunpack.c.l.s4 1983009808
        %v554 = vunpack.c.0.s8 %v553
        %v555 = vlaneseq
        %v556 = vshrl.u32 %v555, 7
        %v557 = vsub.s32 %v554, %v556
        %v558 = vrot.slane %v551, %v557
        %v559 = vcombine.low %v550, %v558
        %v561 = vunpack.c.l.s4 1934713408
        %v562 = vunpack.c.0.s8 %v561
        %v563 = vlaneseq
        %v564 = vshrl.u32 %v563, 7
        %v565 = vsub.s32 %v562, %v564
        %v566 = vrot.slane %v559, %v565
        %v567 = vcombine.high %v566, 0
        %v568 = vcombine.low %v409, %v425
        %v570 = vunpack.c.l.s4 1983009808
        %v571 = vunpack.c.0.s8 %v570
        %v572 = vlaneseq
        %v573 = vshrl.u32 %v572, 7
        %v574 = vsub.s32 %v571, %v573
        %v575 = vrot.slane %v568, %v574
        %v576 = vcombine.low %v417, %v433
        %v578 = vunpack.c.l.s4 1983009808
        %v579 = vunpack.c.0.s8 %v578
        %v580 = vlaneseq
        %v581 = vshrl.u32 %v580, 7
        %v582 = vsub.s32 %v579, %v581
        %v583 = vrot.slane %v576, %v582
        %v584 = vcombine.low %v575, %v583
        %v586 = vunpack.c.l.s4 1934713408
        %v587 = vunpack.c.0.s8 %v586
        %v588 = vlaneseq
        %v589 = vshrl.u32 %v588, 7
        %v590 = vsub.s32 %v587, %v589
        %v591 = vrot.slane %v584, %v590
        %v592 = vcombine.high %v591, 0
        %v595 = vpack.i.b16 %v591, %v566
        %v597 = vshrl.u32 %v566, 16
        %v598 = vshrl.u32 %v591, 16
        %v599 = vpack.i.b16 %v598, %v597
        %v603 = vpack.i.b16 %v592, %v567
        %v605 = vshrl.u32 %v567, 16
        %v606 = vshrl.u32 %v592, 16
        %v607 = vpack.i.b16 %v606, %v605
        %vm609 = vcmask 60416
        %610 = vst.msk [vmem:[%s250] sm:$0xf] %vm609, %v595
        %611 = vst.msk [vmem:[%s250 + $0x4] sm:$0xf] %vm609, %v599
        %612 = vst.msk [vmem:[%s250 + $0x8] sm:$0xf] %vm609, %v603
        %613 = vst.msk [vmem:[%s250 + $0xc] sm:$0xf] %vm609, %v607
        %v614 = vcombine.low %v513, %v529
        %v616 = vunpack.c.l.s4 1983009808
        %v617 = vunpack.c.0.s8 %v616
        %v618 = vlaneseq
        %v619 = vshrl.u32 %v618, 7
        %v620 = vsub.s32 %v617, %v619
        %v621 = vrot.slane %v614, %v620
        %v622 = vcombine.low %v521, %v537
        %v624 = vunpack.c.l.s4 1983009808
        %v625 = vunpack.c.0.s8 %v624
        %v626 = vlaneseq
        %v627 = vshrl.u32 %v626, 7
        %v628 = vsub.s32 %v625, %v627
        %v629 = vrot.slane %v622, %v628
        %v630 = vcombine.low %v621, %v629
        %v632 = vunpack.c.l.s4 1934713408
        %v633 = vunpack.c.0.s8 %v632
        %v634 = vlaneseq
        %v635 = vshrl.u32 %v634, 7
        %v636 = vsub.s32 %v633, %v635
        %v637 = vrot.slane %v630, %v636
        %v638 = vcombine.high %v637, 0
        %v639 = vcombine.low %v517, %v533
        %v641 = vunpack.c.l.s4 1983009808
        %v642 = vunpack.c.0.s8 %v641
        %v643 = vlaneseq
        %v644 = vshrl.u32 %v643, 7
        %v645 = vsub.s32 %v642, %v644
        %v646 = vrot.slane %v639, %v645
        %v647 = vcombine.low %v525, %v541
        %v649 = vunpack.c.l.s4 1983009808
        %v650 = vunpack.c.0.s8 %v649
        %v651 = vlaneseq
        %v652 = vshrl.u32 %v651, 7
        %v653 = vsub.s32 %v650, %v652
        %v654 = vrot.slane %v647, %v653
        %v655 = vcombine.low %v646, %v654
        %v657 = vunpack.c.l.s4 1934713408
        %v658 = vunpack.c.0.s8 %v657
        %v659 = vlaneseq
        %v660 = vshrl.u32 %v659, 7
        %v661 = vsub.s32 %v658, %v660
        %v662 = vrot.slane %v655, %v661
        %v663 = vcombine.high %v662, 0
        %v666 = vpack.i.b16 %v662, %v637
        %v668 = vshrl.u32 %v637, 16
        %v669 = vshrl.u32 %v662, 16
        %v670 = vpack.i.b16 %v669, %v668
        %v674 = vpack.i.b16 %v663, %v638
        %v676 = vshrl.u32 %v638, 16
        %v677 = vshrl.u32 %v663, 16
        %v678 = vpack.i.b16 %v677, %v676
        %680 = vst.msk [vmem:[%s257] sm:$0xf] %vm609, %v666
        %681 = vst.msk [vmem:[%s257 + $0x4] sm:$0xf] %vm609, %v670
        %682 = vst.msk [vmem:[%s257 + $0x8] sm:$0xf] %vm609, %v674
        %683 = vst.msk [vmem:[%s257 + $0xc] sm:$0xf] %vm609, %v678
        %s684 = sand.u32 %s118, 1
        %s685 = scalar_lea.sflag [#allocation4], %s684
        %s686 = sand.u32 %s118, 1
        %s687 = smul.addr %s686, 16
        %s688 = scalar_lea.vmem [#allocation7], %s687
        %s689 = sand.u32 %s146, 1
        %s690 = scalar_lea.sflag [#allocation9], %s689
        %s691 = sand.u32 %s146, 1
        %s692 = smul.addr %s691, 16
        %s693 = scalar_lea.vmem [#allocation8], %s692
        // Predicated region
        $region41: #{tpu_custom_call.1} parent=31 // pred_check
          %p694 = pneg %p128
        $region42: #{tpu_custom_call.1} parent=31 // pred_check_branch
          %696 = sbr.rel (%p694) target = $region44
        $region43: #{tpu_custom_call.1} parent=31 // pred_region
          %s698 = ssub.s32 256, 256
          %699 = vsyncadd %s685, %s698
          %s700 = smul.addr %s30, 4
          %s701 = sadd.s32 %s31, %s700
          %s702 = smul.addr %s701, 64
          %s703 = scalar_lea.hbm %s3, %s702
          %s704 = sshll.u32 %s688, 4
          %s705 = int_to_ptr.vmem [resolvable:$true] %s704
          %710 = dma.vmem_to_hbm [thread:$0]  %s705, 256, %s703, %s685, 64, 64, 4
        $region44: #{tpu_custom_call.1} parent=31 // pred_fallthru
          _
        // Predicated region
        $region45: #{tpu_custom_call.1} parent=31 // pred_check
          %p711 = pneg %p156
        $region46: #{tpu_custom_call.1} parent=31 // pred_check_branch
          %713 = sbr.rel (%p711) target = $region48
        $region47: #{tpu_custom_call.1} parent=31 // pred_region
          %s715 = ssub.s32 256, 256
          %716 = vsyncadd %s690, %s715
          %s717 = smul.addr %s30, 4
          %s718 = sadd.s32 %s31, %s717
          %s719 = smul.addr %s718, 64
          %s720 = scalar_lea.hbm %s4, %s719
          %s721 = sshll.u32 %s693, 4
          %s722 = int_to_ptr.vmem [resolvable:$true] %s721
          %727 = dma.vmem_to_hbm [thread:$0]  %s722, 256, %s720, %s690, 64, 64, 4
        $region48: #{tpu_custom_call.1} parent=31 // pred_fallthru
          _
      $region32: #{tpu_custom_call.1} parent=5 // pred_fallthru
        _
      %p728 = scmp.le.s32.totalorder 2, %s21
      // Predicated region
      $region49: #{tpu_custom_call.1} parent=5 // pred_check
        %p729 = pneg %p728
      $region50: #{tpu_custom_call.1} parent=5 // pred_check_branch
        %731 = sbr.rel (%p729) target = $region52
      $region51: #{tpu_custom_call.1} parent=5 // pred_region
        %s732 = ssub.s32 %s21, 2
        // Predicated region
        $region53: #{tpu_custom_call.1} parent=51 // pred_check
          %p733 = pneg %p134
        $region54: #{tpu_custom_call.1} parent=51 // pred_check_branch
          %735 = sbr.rel (%p733) target = $region56
        $region55: #{tpu_custom_call.1} parent=51 // pred_region
          %s736 = sand.u32 %s119, 1
          %s737 = scalar_lea.sflag [#allocation4], %s736
          %s738 = sand.u32 %s119, 1
          %s739 = smul.addr %s738, 16
          %s740 = scalar_lea.vmem [#allocation7], %s739
          %741 = dma.done %s737, 256
        $region56: #{tpu_custom_call.1} parent=51 // pred_fallthru
          _
        // Predicated region
        $region57: #{tpu_custom_call.1} parent=51 // pred_check
          %p742 = pneg %p162
        $region58: #{tpu_custom_call.1} parent=51 // pred_check_branch
          %744 = sbr.rel (%p742) target = $region60
        $region59: #{tpu_custom_call.1} parent=51 // pred_region
          %s745 = sand.u32 %s147, 1
          %s746 = scalar_lea.sflag [#allocation9], %s745
          %s747 = sand.u32 %s147, 1
          %s748 = smul.addr %s747, 16
          %s749 = scalar_lea.vmem [#allocation8], %s748
          %750 = dma.done %s746, 256
        $region60: #{tpu_custom_call.1} parent=51 // pred_fallthru
          _
      $region52: #{tpu_custom_call.1} parent=5 // pred_fallthru
        _
    $region6: #{tpu_custom_call.1} parent=1 // loop_footer
      %s25 = sadd.s32 1, %s21
    $region7: #{tpu_custom_call.1} parent=1 // loop_footer_branch
      %20 = sbr.rel target = $region3
    $region8: #{tpu_custom_call.1} parent=1 // loop_exit
      _
    %751 = vsyncpa [#allocation3], 1
    %s752 = scalar_lea.sflag [#allocation3], 1
    %753 = vsyncpa %s752, 1
    %754 = vsyncpa [#allocation6], 1
    %755 = vsyncpa [#allocation4], 1
    %s756 = scalar_lea.sflag [#allocation4], 1
    %757 = vsyncpa %s756, 1
    %758 = vsyncpa [#allocation9], 1
    %s759 = scalar_lea.sflag [#allocation9], 1
    %760 = vsyncpa %s759, 1

</llo_original>
